<compile_context>
chip_gen: v7x
topology: tpu7x:2x2x1
jax: 0.10.0
libtpu: 0.0.40
codegen_flags: <defaults>
</compile_context>

<pallas_src>
import jax
import jax.numpy as jnp
import numpy as np
from jax.experimental import pallas as pl
from jax.experimental.pallas import tpu as pltpu


# ----------------------------- in-kernel helpers --------------------------- #

def _softmax_finalize(o_ref, acc_ref):
    """Row softmax over the accumulated scores; lane-dense (b_tile, S) store."""
    b_tile, S = o_ref.shape
    s_all = acc_ref[...].reshape(S, b_tile)        # (S, b)  — leading-dim merge of (nk, s_tile, b)
    s_bs = s_all.T                                 # (b, S)  — lane-dense, softmax over last axis
    m = jnp.max(s_bs, axis=1, keepdims=True)
    p = jnp.exp(s_bs - m)
    denom = jnp.sum(p, axis=1, keepdims=True)
    o_ref[...] = p * pl.reciprocal(denom, approx=False)


def _store_tile_and_maybe_finalize(scores_sb, o_ref, acc_ref):
    """Stash this S-tile's scores; on the last S tile compute the softmax."""
    k = pl.program_id(1)
    acc_ref[k] = scores_sb.astype(acc_ref.dtype)   # dynamic index on leading (untiled) axis

    @pl.when(k == pl.num_programs(1) - 1)
    def _():
        _softmax_finalize(o_ref, acc_ref)


# ----------------------------- kernels ------------------------------------ #

def dot_attn_kernel(h_ref, e_ref, o_ref, acc_ref):
    # scores[s, b] = sum_h hidden[b, h] * enc[s, b, h]
    h32 = h_ref[...].astype(jnp.float32)                         # (b_tile, H)
    scores_sb = jnp.sum(h32[None, :, :] * e_ref[...], axis=2)    # (s_tile, b_tile), f32
    _store_tile_and_maybe_finalize(scores_sb, o_ref, acc_ref)


def general_attn_kernel(h_ref, e_ref, w_ref, b_ref, o_ref, acc_ref):
    # Linear: energy = enc @ W.T + b.
    # sum_h h*(e@W.T + b) == sum_h (h@W)*e + h.b  -> one tiny (b_tile,H)x(H,H) matmul,
    # no (S,B,H) energy temporary, W used untransposed.
    h = h_ref[...]
    h32 = h.astype(jnp.float32)
    hw = jnp.dot(h, w_ref[...], preferred_element_type=jnp.float32)            # (b_tile, H)
    hb = jnp.dot(b_ref[...].astype(jnp.float32), h32.T,
                 preferred_element_type=jnp.float32)                            # (1, b_tile)
    scores_sb = jnp.sum(hw[None, :, :] * e_ref[...], axis=2) + hb               # (s_tile, b_tile)
    _store_tile_and_maybe_finalize(scores_sb, o_ref, acc_ref)


def concat_attn_kernel(h_ref, e_ref, wht_ref, wet_ref, b_ref, v_ref, o_ref, acc_ref):
    # Linear(cat(h_expanded, enc)) == h @ Wh.T + enc @ We.T + b  with W = [Wh | We].
    # Wh.T / We.T are pre-transposed in the wrapper (no in-kernel weight transpose).
    s_tile, b_tile, H = e_ref.shape
    h = h_ref[...]
    e2d = e_ref[...].reshape(s_tile * b_tile, H)
    h_part = jnp.dot(h, wht_ref[...], preferred_element_type=jnp.float32)       # (b_tile, H)
    e_part = jnp.dot(e2d, wet_ref[...], preferred_element_type=jnp.float32)     # (s*b, H)
    energy = jnp.tanh(e_part.reshape(s_tile, b_tile, H)
                      + h_part[None, :, :]
                      + b_ref[...].astype(jnp.float32)[None, :, :])             # (s_tile, b, H)
    scores_sb = jnp.sum(v_ref[...].astype(jnp.float32)[None, :, :] * energy,
                        axis=2)                                                  # (s_tile, b_tile)
    _store_tile_and_maybe_finalize(scores_sb, o_ref, acc_ref)


# ----------------------------- wrapper ------------------------------------ #

def _choose_s_tile(S, b_tile, H, itemsize, budget_bytes=2 * 1024 * 1024):
    """Largest divisor of S whose enc block (s_tile, b_tile, H) fits the per-buffer
    budget (conservative for v7x's 64 MiB VMEM; x2 for double buffering)."""
    max_rows = max(1, budget_bytes // max(1, b_tile * H * itemsize))
    if S <= max_rows:
        return S
    for t in range(max_rows, 0, -1):
        if S % t == 0:
            return t
    return S


def attn_forward(method, hidden, encoder_outputs, params=None, *, s_tile=None,
                 b_tile=None):
    """Replicates Attn.forward: returns (B, 1, S) attention weights."""
    _, B, H = hidden.shape
    S = encoder_outputs.shape[0]
    # Keep caller dtypes (bf16 stays bf16 through HBM->VMEM); reshape is free.
    h2d = hidden.reshape(B, H)
    enc = encoder_outputs

    if b_tile is None:
        b_tile = B if (B % 16 != 0) else (B // 2)   # >=2 batch blocks for v7x megacore when possible
    assert B % b_tile == 0 and (b_tile == B or b_tile % 8 == 0)
    if s_tile is None:
        s_tile = _choose_s_tile(S, b_tile, H, enc.dtype.itemsize)
    # TODO(synk): mask a ragged final S tile (pad scores with -inf) to support S % s_tile != 0.
    assert S % s_tile == 0
    nb, nk = B // b_tile, S // s_tile

    if method == 'dot':
        kernel = dot_attn_kernel
        extra = ()
        extra_specs = ()
    elif method == 'general':
        kernel = general_attn_kernel
        extra = (params['W'], params['b'].reshape(1, H))
        extra_specs = (pl.BlockSpec((H, H), lambda b, k: (0, 0)),
                       pl.BlockSpec((1, H), lambda b, k: (0, 0)))
    elif method == 'concat':
        W = params['W']                                  # (H, 2H) = [Wh | We]
        kernel = concat_attn_kernel
        extra = (W[:, :H].T, W[:, H:].T,                 # pre-transposed, static params
                 params['b'].reshape(1, H), params['v'].reshape(1, H))
        extra_specs = (pl.BlockSpec((H, H), lambda b, k: (0, 0)),
                       pl.BlockSpec((H, H), lambda b, k: (0, 0)),
                       pl.BlockSpec((1, H), lambda b, k: (0, 0)),
                       pl.BlockSpec((1, H), lambda b, k: (0, 0)))
    else:
        raise ValueError(method, 'is not an appropriate attention method.')

    in_specs = [
        pl.BlockSpec((b_tile, H), lambda b, k: (b, 0)),            # hidden: resident per b block
        pl.BlockSpec((s_tile, b_tile, H), lambda b, k: (k, b, 0)),  # enc: streamed over S tiles
        *extra_specs,
    ]
    # Output block spans the full S axis and is revisited across k (resident accumulator);
    # it is written lane-dense once, on the last S tile.
    out_spec = pl.BlockSpec((b_tile, S), lambda b, k: (b, 0))

    weights_bs = pl.pallas_call(
        kernel,
        out_shape=jax.ShapeDtypeStruct((B, S), jnp.float32),
        grid=(nb, nk),
        in_specs=in_specs,
        out_specs=out_spec,
        scratch_shapes=[pltpu.VMEM((nk, s_tile, b_tile), jnp.float32)],
        compiler_params=pltpu.CompilerParams(
            dimension_semantics=("parallel", "arbitrary")),
    )(h2d, enc, *extra)

    # Layout glue: (B, S) -> (B, 1, S) is a free reshape (no transpose, no extra pass).
    return weights_bs.reshape(B, 1, S)


# ----------------------------- reference ---------------------------------- #

def attn_reference(method, hidden, encoder_outputs, params=None):
    hidden = hidden.astype(jnp.float32)
    encoder_outputs = encoder_outputs.astype(jnp.float32)
    if method == 'dot':
        scores = jnp.sum(hidden * encoder_outputs, axis=2)
    elif method == 'general':
        energy = encoder_outputs @ params['W'].T + params['b']
        scores = jnp.sum(hidden * energy, axis=2)
    elif method == 'concat':
        hexp = jnp.broadcast_to(hidden, encoder_outputs.shape)
        cat = jnp.concatenate([hexp, encoder_outputs], axis=2)
        energy = jnp.tanh(cat @ params['W'].T + params['b'])
        scores = jnp.sum(params['v'] * energy, axis=2)
    else:
        raise ValueError(method)
    scores = scores.T
    return jax.nn.softmax(scores, axis=1)[:, None, :]


# ------------------------------- main -------------------------------------- #

if __name__ == "__main__":
    B, H = 2, 32   # batch, hidden_size

    key = jax.random.PRNGKey(0)
    k_h, k_e, k_wg, k_bg, k_wc, k_bc, k_v = jax.random.split(key, 7)

    params_general = {
        'W': 0.1 * jax.random.normal(k_wg, (H, H), dtype=jnp.float32),
        'b': 0.1 * jax.random.normal(k_bg, (H,), dtype=jnp.float32),
    }
    params_concat = {
        'W': 0.1 * jax.random.normal(k_wc, (H, 2 * H), dtype=jnp.float32),
        'b': 0.1 * jax.random.normal(k_bc, (H,), dtype=jnp.float32),
        'v': 0.1 * jax.random.normal(k_v, (H,), dtype=jnp.float32),
    }

    # Two configs: single S tile (S=8) and two S tiles (S=16, s_tile=8) to exercise
    # the streamed/accumulated path.
    for S, s_tile in ((8, None), (16, 8)):
        hidden = jax.random.normal(k_h, (1, B, H), dtype=jnp.float32)
        encoder_outputs = jax.random.normal(k_e, (S, B, H), dtype=jnp.float32)

        for method, params in (('dot', None),
                               ('general', params_general),
                               ('concat', params_concat)):
            out = attn_forward(method, hidden, encoder_outputs, params,
                               s_tile=s_tile)
            out = jax.block_until_ready(out)
            ref = attn_reference(method, hidden, encoder_outputs, params)
            assert out.shape == (B, 1, S), (method, out.shape)
            np.testing.assert_allclose(np.asarray(out), np.asarray(ref),
                                       rtol=1e-5, atol=1e-5)

    print("KERNEL_OK")
</pallas_src>

<mosaic_0001>
module attributes {stable_mosaic.version = 11 : i64} {
  func.func @dot_attn_kernel(%arg0: i32, %arg1: i32, %arg2: memref<2x32xf32, #tpu.memory_space<vmem>>, %arg3: memref<8x2x32xf32, #tpu.memory_space<vmem>>, %arg4: memref<2x8xf32, #tpu.memory_space<vmem>>, %arg5: memref<1x8x2xf32, #tpu.memory_space<vmem>>) attributes {dimension_semantics = [#tpu.dimension_semantics<parallel>, #tpu.dimension_semantics<arbitrary>], iteration_bounds = array<i64: 1, 1>, scalar_prefetch = 0 : i64, scratch_operands = 1 : i64, tpu.core_type = #tpu.core_type<tc>, window_params = [{transform_indices = @transform_0, window_bounds = array<i64: 2, 32>}, {transform_indices = @transform_1, window_bounds = array<i64: 8, 2, 32>}, {transform_indices = @transform_2, window_bounds = array<i64: 2, 8>}]} {
    %c0 = arith.constant 0 : index
    %c0_0 = arith.constant 0 : index
    %0 = vector.load %arg2[%c0, %c0_0] : memref<2x32xf32, #tpu.memory_space<vmem>>, vector<2x32xf32>
    %1 = vector.shape_cast %0 : vector<2x32xf32> to vector<1x2x32xf32>
    %c0_1 = arith.constant 0 : index
    %c0_2 = arith.constant 0 : index
    %c0_3 = arith.constant 0 : index
    %2 = vector.load %arg3[%c0_1, %c0_2, %c0_3] : memref<8x2x32xf32, #tpu.memory_space<vmem>>, vector<8x2x32xf32>
    %3 = vector.broadcast %1 : vector<1x2x32xf32> to vector<8x2x32xf32>
    %4 = arith.mulf %3, %2 : vector<8x2x32xf32>
    %cst = arith.constant dense<0.000000e+00> : vector<8x2xf32>
    %5 = vector.multi_reduction <add>, %4, %cst [2] : vector<8x2x32xf32> to vector<8x2xf32>
    %6 = arith.index_cast %arg1 : i32 to index
    %c0_4 = arith.constant 0 : index
    %c0_5 = arith.constant 0 : index
    %7 = vector.load %arg5[%6, %c0_4, %c0_5] : memref<1x8x2xf32, #tpu.memory_space<vmem>>, vector<1x8x2xf32>
    %8 = vector.shape_cast %7 : vector<1x8x2xf32> to vector<8x2xf32>
    %9 = vector.shape_cast %5 : vector<8x2xf32> to vector<1x8x2xf32>
    tpu.vector_store %arg5[%6, %c0_4, %c0_5], %9 {strides = array<i32>} : memref<1x8x2xf32, #tpu.memory_space<vmem>>, vector<1x8x2xf32>,
    %c0_i32 = arith.constant 0 : i32
    %10 = arith.cmpi eq, %arg1, %c0_i32 : i32
    %11 = arith.extui %10 : i1 to i32
    %c0_i32_6 = arith.constant 0 : i32
    %12 = arith.cmpi ne, %11, %c0_i32_6 : i32
    scf.if %12 {
      %c0_7 = arith.constant 0 : index
      %c0_8 = arith.constant 0 : index
      %c0_9 = arith.constant 0 : index
      %13 = vector.load %arg5[%c0_7, %c0_8, %c0_9] : memref<1x8x2xf32, #tpu.memory_space<vmem>>, vector<1x8x2xf32>
      %14 = vector.shape_cast %13 : vector<1x8x2xf32> to vector<8x2xf32>
      %15 = tpu.transpose %14, [1, 0] : vector<8x2xf32> -> vector<2x8xf32>
      %cst_10 = arith.constant dense<0xFF800000> : vector<2xf32>
      %16 = vector.multi_reduction <maximumf>, %15, %cst_10 [1] : vector<2x8xf32> to vector<2xf32>
      %17 = vector.shape_cast %16 : vector<2xf32> to vector<2x1xf32>
      %18 = vector.broadcast %17 : vector<2x1xf32> to vector<2x8xf32>
      %19 = arith.subf %15, %18 : vector<2x8xf32>
      %20 = math.exp %19 : vector<2x8xf32>
      %cst_11 = arith.constant dense<0.000000e+00> : vector<2xf32>
      %21 = vector.multi_reduction <add>, %20, %cst_11 [1] : vector<2x8xf32> to vector<2xf32>
      %22 = vector.shape_cast %21 : vector<2xf32> to vector<2x1xf32>
      %23 = tpu.reciprocal %22 : vector<2x1xf32> -> vector<2x1xf32>
      %24 = vector.broadcast %23 : vector<2x1xf32> to vector<2x8xf32>
      %25 = arith.mulf %20, %24 : vector<2x8xf32>
      %c0_12 = arith.constant 0 : index
      %c0_13 = arith.constant 0 : index
      %26 = vector.load %arg4[%c0_12, %c0_13] : memref<2x8xf32, #tpu.memory_space<vmem>>, vector<2x8xf32>
      tpu.vector_store %arg4[%c0_12, %c0_13], %25 {strides = array<i32>} : memref<2x8xf32, #tpu.memory_space<vmem>>, vector<2x8xf32>,
    } else {
    }
    return
  }
  func.func @transform_0(%arg0: i32, %arg1: i32) -> (i32, i32) {
    %c0_i32 = arith.constant 0 : i32
    %c0_i32_0 = arith.constant 0 : i32
    return %arg0, %c0_i32 : i32, i32
  }
  func.func @transform_1(%arg0: i32, %arg1: i32) -> (i32, i32, i32) {
    %c0_i32 = arith.constant 0 : i32
    %c0_i32_0 = arith.constant 0 : i32
    return %arg1, %arg0, %c0_i32 : i32, i32, i32
  }
  func.func @transform_2(%arg0: i32, %arg1: i32) -> (i32, i32) {
    %c0_i32 = arith.constant 0 : i32
    %c0_i32_0 = arith.constant 0 : i32
    return %arg0, %c0_i32 : i32, i32
  }
}

</mosaic_0001>

<llo_original>
// kernel: tpu_custom_call.1
$region0: #{tpu_custom_call.1}
  #allocation0 [shape = 'u32[]', space=smem, size = 0x4, offset = 0x4, fixed_abs, tag = 'smem constant byte address 0x4 - core index']
  #allocation1 [shape = 'u32[144,128]{1,0:T(1,128)}', space=vmem, size = 0x12000, scoped, tag = 'internal scratch']
  #allocation2 [shape = 'f32[1,8,2]{2,1,0:T(8,128)}', space=vmem, size = 0x1000, scoped, tag = 'scratch operand']
  %s0 = inlined_call_operand.hbm [shape: f32[2,32], index: 0, kind: input, shape index: {}]
  %s1 = inlined_call_operand.hbm [shape: f32[8,2,32], index: 1, kind: input, shape index: {}]
  %s2 = inlined_call_operand.hbm [shape: f32[2,8], index: 2, kind: output, shape index: {}]
  %s3 = sld [smem:[#allocation0]]
  $region30: #{tpu_custom_call.1} parent=0
    _
  %s5 = ssub.s32 1, %s3
  %s6 = scalar_select 0, %s5, %s3
  $region1: #{tpu_custom_call.1} parent=0
    #allocation3 [shape = 'u8[1024]{0}', space=vmem, size = 0x400, scoped, tag = 'input window, operand 0, single buffered']
    #allocation4 [shape = 's32[1]{0}', space=sflag, size = 0x4, scoped, tag = 'scoped memory for tpu_custom_call.1']
    #allocation5 [shape = 's32[1]{0}', space=sflag, size = 0x4, scoped, tag = 'scoped memory for tpu_custom_call.1']
    #allocation6 [shape = 'u8[8192]{0}', space=vmem, size = 0x2000, scoped, tag = 'input window, operand 1, single buffered']
    #allocation7 [shape = 's32[1]{0}', space=sflag, size = 0x4, scoped, tag = 'scoped memory for tpu_custom_call.1']
    #allocation8 [shape = 'u8[1024]{0}', space=vmem, size = 0x400, scoped, tag = 'output window, operand 0, single buffered']
    %7 = vsyncpa [#allocation4], 0
    %8 = vsyncpa [#allocation7], 0
    %9 = vsyncpa [#allocation5], 0
    // Predicated region
    $region2: #{tpu_custom_call.1} parent=1 // pred_check
      _
    $region3: #{tpu_custom_call.1} parent=1 // pred_check_branch
      %11 = sbr.rel (0) target = $region5
    $region4: #{tpu_custom_call.1} parent=1 // pred_region
      %s13 = ssub.s32 32, 32
      %14 = vsyncadd [#allocation4], %s13
      %s16 = sshll.u32 [#allocation3], 4
      %s17 = int_to_ptr.vmem [resolvable:$true] %s16
      %19 = dma.hbm_to_vmem [thread:$0]  %s0, 32, %s17, [#allocation4]
    $region5: #{tpu_custom_call.1} parent=1 // pred_fallthru
      _
    // Predicated region
    $region6: #{tpu_custom_call.1} parent=1 // pred_check
      _
    $region7: #{tpu_custom_call.1} parent=1 // pred_check_branch
      %21 = sbr.rel (0) target = $region9
    $region8: #{tpu_custom_call.1} parent=1 // pred_region
      %s23 = ssub.s32 256, 256
      %24 = vsyncadd [#allocation7], %s23
      %s25 = sshll.u32 [#allocation6], 4
      %s26 = int_to_ptr.vmem [resolvable:$true] %s25
      %31 = dma.hbm_to_vmem [thread:$0]  %s1, 256, %s26, [#allocation7], 32, 32, 2
    $region9: #{tpu_custom_call.1} parent=1 // pred_fallthru
      _
    // Predicated region
    $region10: #{tpu_custom_call.1} parent=1 // pred_check
      _
    $region11: #{tpu_custom_call.1} parent=1 // pred_check_branch
      %33 = sbr.rel (0) target = $region13
    $region12: #{tpu_custom_call.1} parent=1 // pred_region
      %34 = dma.done [#allocation4], 32
    $region13: #{tpu_custom_call.1} parent=1 // pred_fallthru
      _
    // Predicated region
    $region14: #{tpu_custom_call.1} parent=1 // pred_check
      _
    $region15: #{tpu_custom_call.1} parent=1 // pred_check_branch
      %36 = sbr.rel (0) target = $region17
    $region16: #{tpu_custom_call.1} parent=1 // pred_region
      %37 = dma.done [#allocation7], 256
    $region17: #{tpu_custom_call.1} parent=1 // pred_fallthru
      _
    %v38 = vld [vmem:[#allocation3] sm:$0x3]
    %v39 = vld [vmem:[#allocation6] sm:$0x3]
    %v40 = vld [vmem:[#allocation6 + $0x2] sm:$0x3]
    %v41 = vld [vmem:[#allocation6 + $0x4] sm:$0x3]
    %v42 = vld [vmem:[#allocation6 + $0x6] sm:$0x3]
    %v43 = vld [vmem:[#allocation6 + $0x8] sm:$0x3]
    %v44 = vld [vmem:[#allocation6 + $0xa] sm:$0x3]
    %v45 = vld [vmem:[#allocation6 + $0xc] sm:$0x3]
    %v46 = vld [vmem:[#allocation6 + $0xe] sm:$0x3]
    %v47 = vmul.f32 %v38, %v39
    %v48 = vmul.f32 %v38, %v40
    %v49 = vmul.f32 %v38, %v41
    %v50 = vmul.f32 %v38, %v42
    %v51 = vmul.f32 %v38, %v43
    %v52 = vmul.f32 %v38, %v44
    %v53 = vmul.f32 %v38, %v45
    %v54 = vmul.f32 %v38, %v46
    %vm55 = vcmask 254976
    %v56 = vsel %vm55, %v47, 0.0
    %57 = vadd.xlane.f32.xlu0 %v56
    %v58 = vpop.xlane.xlu0 %57
    %v59 = vsel %vm55, %v48, 0.0
    %60 = vadd.xlane.f32.xlu0 %v59
    %v61 = vpop.xlane.xlu0 %60
    %v62 = vsel %vm55, %v49, 0.0
    %63 = vadd.xlane.f32.xlu0 %v62
    %v64 = vpop.xlane.xlu0 %63
    %v65 = vsel %vm55, %v50, 0.0
    %66 = vadd.xlane.f32.xlu0 %v65
    %v67 = vpop.xlane.xlu0 %66
    %v68 = vsel %vm55, %v51, 0.0
    %69 = vadd.xlane.f32.xlu0 %v68
    %v70 = vpop.xlane.xlu0 %69
    %v71 = vsel %vm55, %v52, 0.0
    %72 = vadd.xlane.f32.xlu0 %v71
    %v73 = vpop.xlane.xlu0 %72
    %v74 = vsel %vm55, %v53, 0.0
    %75 = vadd.xlane.f32.xlu0 %v74
    %v76 = vpop.xlane.xlu0 %75
    %v77 = vsel %vm55, %v54, 0.0
    %78 = vadd.xlane.f32.xlu0 %v77
    %v79 = vpop.xlane.xlu0 %78
    %v88 = vlaneseq
    %v89 = vand.u32 %v88, 127
    %v90 = vlaneseq
    %v91 = vshrl.u32 %v90, 7
    %v92 = vsub.s32 %v89, %v91
    %v93 = vrot.slane %v58, %v92
    %v94 = vlaneseq
    %v95 = vshrl.u32 %v94, 7
    %v96 = vsub.s32 %v89, %v95
    %v97 = vrot.slane %v61, %v96
    %v98 = vlaneseq
    %v99 = vshrl.u32 %v98, 7
    %v100 = vsub.s32 %v89, %v99
    %v101 = vrot.slane %v64, %v100
    %v102 = vlaneseq
    %v103 = vshrl.u32 %v102, 7
    %v104 = vsub.s32 %v89, %v103
    %v105 = vrot.slane %v67, %v104
    %v106 = vlaneseq
    %v107 = vshrl.u32 %v106, 7
    %v108 = vsub.s32 %v89, %v107
    %v109 = vrot.slane %v70, %v108
    %v110 = vlaneseq
    %v111 = vshrl.u32 %v110, 7
    %v112 = vsub.s32 %v89, %v111
    %v113 = vrot.slane %v73, %v112
    %v114 = vlaneseq
    %v115 = vshrl.u32 %v114, 7
    %v116 = vsub.s32 %v89, %v115
    %v117 = vrot.slane %v76, %v116
    %v118 = vlaneseq
    %v119 = vshrl.u32 %v118, 7
    %v120 = vsub.s32 %v89, %v119
    %v121 = vrot.slane %v79, %v120
    %vm122 = vcmask 1041409
    %v123 = vsel %vm122, %v97, %v93
    %vm124 = vcmask 1042434
    %v125 = vsel %vm124, %v101, %v123
    %vm126 = vcmask 1043459
    %v127 = vsel %vm126, %v105, %v125
    %vm128 = vcmask 1044484
    %v129 = vsel %vm128, %v109, %v127
    %vm130 = vcmask 1045509
    %v131 = vsel %vm130, %v113, %v129
    %vm132 = vcmask 1046534
    %v133 = vsel %vm132, %v117, %v131
    %vm134 = vcmask 1047559
    %v135 = vsel %vm134, %v121, %v133
    %s137 = smul.u32 0, 8
    %s138 = scalar_lea.vmem [#allocation2], %s137
    %vm139 = vcmask 15360
    %140 = vst.msk [vmem:[%s138] sm:$0xff] %vm139, %v135
    %p141 = scmp.eq.s32.totalorder 0, 0
    // Predicated region
    $region18: #{tpu_custom_call.1} parent=1 // pred_check
      %p142 = pneg %p141
    $region19: #{tpu_custom_call.1} parent=1 // pred_check_branch
      %144 = sbr.rel (%p142) target = $region21
    $region20: #{tpu_custom_call.1} parent=1 // pred_region
      %v145 = vld [vmem:[#allocation2] sm:$0xff]
      %146 = vxpose.xlu0.b32.start [1/16] %v145, 128
      %147 = vxpose.xlu0.b32.cont [2/16] 0.0, 128
      %148 = vxpose.xlu0.b32.cont [3/16] 0.0, 128
      %149 = vxpose.xlu0.b32.cont [4/16] 0.0, 128
      %150 = vxpose.xlu0.b32.cont [5/16] 0.0, 128
      %151 = vxpose.xlu0.b32.cont [6/16] 0.0, 128
      %152 = vxpose.xlu0.b32.cont [7/16] 0.0, 128
      %153 = vxpose.xlu0.b32.cont [8/16] 0.0, 128
      %154 = vxpose.xlu0.b32.cont [9/16] 0.0, 128
      %155 = vxpose.xlu0.b32.cont [10/16] 0.0, 128
      %156 = vxpose.xlu0.b32.cont [11/16] 0.0, 128
      %157 = vxpose.xlu0.b32.cont [12/16] 0.0, 128
      %158 = vxpose.xlu0.b32.cont [13/16] 0.0, 128
      %159 = vxpose.xlu0.b32.cont [14/16] 0.0, 128
      %160 = vxpose.xlu0.b32.cont [15/16] 0.0, 128
      %161 = vxpose.xlu0.b32.end [16/16] 0.0, 128
      %v162 = vpop.trf.xlu0
      %v163 = vpop.trf.xlu0
      %v164 = vpop.trf.xlu0
      %v165 = vpop.trf.xlu0
      %v166 = vpop.trf.xlu0
      %v167 = vpop.trf.xlu0
      %v168 = vpop.trf.xlu0
      %v169 = vpop.trf.xlu0
      %v170 = vpop.trf.xlu0
      %v171 = vpop.trf.xlu0
      %v172 = vpop.trf.xlu0
      %v173 = vpop.trf.xlu0
      %v174 = vpop.trf.xlu0
      %v175 = vpop.trf.xlu0
      %v176 = vpop.trf.xlu0
      %v177 = vpop.trf.xlu0
      %vm178 = vcmask 58368
      %v179 = vsel %vm178, %v162, -inf
      %180 = vmax.xlane.f32.xlu0 %v179
      %v181 = vpop.xlane.xlu0 %180
      %v182 = vsub.f32 %v162, %v181
      %v183 = vmul.f32 %v182, 1.442695
      %v184 = vpow.pop %v183
      %v185 = vsel %vm178, %v184, 0.0
      %186 = vadd.xlane.f32.xlu0 %v185
      %v187 = vpop.xlane.xlu0 %186
      %v188 = vrcp.pop %v187
      %v189 = vmul.f32 %v184, %v188
      %190 = vst.msk [vmem:[#allocation8] sm:$0x3] %vm178, %v189
    $region21: #{tpu_custom_call.1} parent=1 // pred_fallthru
      _
    // Predicated region
    $region22: #{tpu_custom_call.1} parent=1 // pred_check
      _
    $region23: #{tpu_custom_call.1} parent=1 // pred_check_branch
      %192 = sbr.rel (0) target = $region25
    $region24: #{tpu_custom_call.1} parent=1 // pred_region
      %s194 = ssub.s32 32, 32
      %195 = vsyncadd [#allocation5], %s194
      %s197 = sshll.u32 [#allocation8], 4
      %s198 = int_to_ptr.vmem [resolvable:$true] %s197
      %200 = dma.vmem_to_hbm [thread:$0]  %s198, 32, %s2, [#allocation5]
    $region25: #{tpu_custom_call.1} parent=1 // pred_fallthru
      _
    // Predicated region
    $region26: #{tpu_custom_call.1} parent=1 // pred_check
      _
    $region27: #{tpu_custom_call.1} parent=1 // pred_check_branch
      %202 = sbr.rel (0) target = $region29
    $region28: #{tpu_custom_call.1} parent=1 // pred_region
      %203 = dma.done [#allocation5], 32
    $region29: #{tpu_custom_call.1} parent=1 // pred_fallthru
      _
    %204 = vsyncpa [#allocation4], 1
    %205 = vsyncpa [#allocation7], 1
    %206 = vsyncpa [#allocation5], 1

</llo_original>
